<compile_context>
chip_gen: v6e
topology: v6e:2x2x1
jax: 0.10.0
libtpu: 0.0.40
codegen_flags: <defaults>
</compile_context>

<pallas_src>
import functools

import jax
import jax.numpy as jnp
from jax.experimental import pallas as pl
from jax.experimental.pallas import tpu as pltpu


def _blur_kernel(x_ref, o_ref, xp_ref, *, H, W):
    """x_ref/o_ref: (1, tc, H, W) blocks. xp_ref: (tc, H+2, W+2) f32 scratch."""
    x = x_ref[0].astype(jnp.float32)                         # (tc, H, W)

    # ---- Build the reflect-padded tile entirely in VMEM -------------------
    xp_ref[:, 1:H + 1, 1:W + 1] = x                          # interior
    xp_ref[:, 1:H + 1, 0:1] = x[:, :, 1:2]                   # left halo  (reflect)
    xp_ref[:, 1:H + 1, W + 1:W + 2] = x[:, :, W - 2:W - 1]   # right halo (reflect)
    xp_ref[:, 0:1, :] = xp_ref[:, 2:3, :]                    # top halo + corners
    xp_ref[:, H + 1:H + 2, :] = xp_ref[:, H - 1:H, :]        # bottom halo + corners

    # ---- Separable [1, 2, 1] passes (adds only, one final scale) ----------
    # Horizontal pass over padded rows: (tc, H+2, W)
    hc = xp_ref[:, :, 1:W + 1]
    h = (xp_ref[:, :, 0:W] + xp_ref[:, :, 2:W + 2]) + (hc + hc)
    # Vertical pass: (tc, H, W)
    vc = h[:, 1:H + 1, :]
    v = (h[:, 0:H, :] + h[:, 2:H + 2, :]) + (vc + vc)

    o_ref[0] = (v * 0.0625).astype(o_ref.dtype)              # / 16 (normalized)


def _pick_channel_tile(C, H, W, target_f32_bytes=1 << 20):
    """Largest divisor of C whose (tc, H, W) f32 tile is <= ~target bytes."""
    cap = max(1, target_f32_bytes // (H * W * 4))
    tc = 1
    for d in range(1, C + 1):
        if C % d == 0 and d <= cap:
            tc = d
    return tc


def blur(x):
    """Pallas equivalent of Blur.forward(x) for NCHW input x."""
    B, C, H, W = x.shape
    tc = _pick_channel_tile(C, H, W)
    grid = (B, C // tc)
    # Note: for extremely large spatial extents (single-channel H*W beyond the
    # VMEM tile budget) an additional H grid axis with a 2-row halo would be
    # needed; StyleGAN2-scale feature maps fit comfortably with C tiling alone.
    return pl.pallas_call(
        functools.partial(_blur_kernel, H=H, W=W),
        out_shape=jax.ShapeDtypeStruct((B, C, H, W), x.dtype),
        grid=grid,
        in_specs=[pl.BlockSpec((1, tc, H, W), lambda b, c: (b, c, 0, 0))],
        out_specs=pl.BlockSpec((1, tc, H, W), lambda b, c: (b, c, 0, 0)),
        scratch_shapes=[pltpu.VMEM((tc, H + 2, W + 2), jnp.float32)],
        compiler_params=pltpu.CompilerParams(
            dimension_semantics=("parallel", "parallel")),
    )(x)


# ---------------------------------------------------------------------------
# Pure-JAX reference (depthwise 3x3 conv, reflect pad) for validation.
_F = jnp.array([1.0, 2.0, 1.0], dtype=jnp.float32)
_K2D = _F[None, :] * _F[:, None]
_K2D = _K2D / jnp.sum(_K2D)


def _blur_reference(x):
    B, C, H, W = x.shape
    xp = jnp.pad(x, ((0, 0), (0, 0), (1, 1), (1, 1)), mode="reflect")
    k = _K2D.astype(x.dtype)
    w = jnp.tile(k[None, None, :, :], (C, 1, 1, 1))          # (C,1,3,3) depthwise
    return jax.lax.conv_general_dilated(
        xp, w, window_strides=(1, 1), padding="VALID",
        dimension_numbers=("NCHW", "OIHW", "NCHW"),
        feature_group_count=C)


if __name__ == "__main__":
    key = jax.random.PRNGKey(0)
    x = jax.random.normal(key, (2, 4, 16, 16), dtype=jnp.float32)

    out = jax.block_until_ready(blur(x))
    ref = jax.block_until_ready(_blur_reference(x))

    assert out.shape == x.shape and out.dtype == x.dtype
    assert jnp.max(jnp.abs(out - ref)) < 1e-5

    print("KERNEL_OK")
</pallas_src>

<mosaic_0001>
module attributes {stable_mosaic.version = 11 : i64} {
  func.func @_blur_kernel(%arg0: i32, %arg1: i32, %arg2: memref<1x4x16x16xf32, #tpu.memory_space<vmem>>, %arg3: memref<1x4x16x16xf32, #tpu.memory_space<vmem>>, %arg4: memref<4x18x18xf32, #tpu.memory_space<vmem>>) attributes {dimension_semantics = [#tpu.dimension_semantics<parallel>, #tpu.dimension_semantics<parallel>], iteration_bounds = array<i64: 2, 1>, scalar_prefetch = 0 : i64, scratch_operands = 1 : i64, tpu.core_type = #tpu.core_type<tc>, window_params = [{transform_indices = @transform_0, window_bounds = array<i64: 1, 4, 16, 16>}, {transform_indices = @transform_1, window_bounds = array<i64: 1, 4, 16, 16>}]} {
    %c0 = arith.constant 0 : index
    %c0_0 = arith.constant 0 : index
    %c0_1 = arith.constant 0 : index
    %c0_2 = arith.constant 0 : index
    %0 = vector.load %arg2[%c0, %c0_0, %c0_1, %c0_2] : memref<1x4x16x16xf32, #tpu.memory_space<vmem>>, vector<1x4x16x16xf32>
    %1 = vector.shape_cast %0 : vector<1x4x16x16xf32> to vector<4x16x16xf32>
    %c0_3 = arith.constant 0 : index
    %c1 = arith.constant 1 : index
    %c1_4 = arith.constant 1 : index
    %2 = vector.load %arg4[%c0_3, %c1, %c1_4] : memref<4x18x18xf32, #tpu.memory_space<vmem>>, vector<4x16x16xf32>
    tpu.vector_store %arg4[%c0_3, %c1, %c1_4], %1 {strides = array<i32>} : memref<4x18x18xf32, #tpu.memory_space<vmem>>, vector<4x16x16xf32>,
    %3 = vector.extract_strided_slice %1 {offsets = [0, 0, 1], sizes = [4, 16, 1], strides = [1, 1, 1]} : vector<4x16x16xf32> to vector<4x16x1xf32>
    %c0_5 = arith.constant 0 : index
    %c1_6 = arith.constant 1 : index
    %c0_7 = arith.constant 0 : index
    %4 = vector.load %arg4[%c0_5, %c1_6, %c0_7] : memref<4x18x18xf32, #tpu.memory_space<vmem>>, vector<4x16x1xf32>
    tpu.vector_store %arg4[%c0_5, %c1_6, %c0_7], %3 {strides = array<i32>} : memref<4x18x18xf32, #tpu.memory_space<vmem>>, vector<4x16x1xf32>,
    %5 = vector.extract_strided_slice %1 {offsets = [0, 0, 14], sizes = [4, 16, 1], strides = [1, 1, 1]} : vector<4x16x16xf32> to vector<4x16x1xf32>
    %c0_8 = arith.constant 0 : index
    %c1_9 = arith.constant 1 : index
    %c17 = arith.constant 17 : index
    %6 = vector.load %arg4[%c0_8, %c1_9, %c17] : memref<4x18x18xf32, #tpu.memory_space<vmem>>, vector<4x16x1xf32>
    tpu.vector_store %arg4[%c0_8, %c1_9, %c17], %5 {strides = array<i32>} : memref<4x18x18xf32, #tpu.memory_space<vmem>>, vector<4x16x1xf32>,
    %c0_10 = arith.constant 0 : index
    %c2 = arith.constant 2 : index
    %c0_11 = arith.constant 0 : index
    %7 = vector.load %arg4[%c0_10, %c2, %c0_11] : memref<4x18x18xf32, #tpu.memory_space<vmem>>, vector<4x1x18xf32>
    %c0_12 = arith.constant 0 : index
    %c0_13 = arith.constant 0 : index
    %c0_14 = arith.constant 0 : index
    %8 = vector.load %arg4[%c0_12, %c0_13, %c0_14] : memref<4x18x18xf32, #tpu.memory_space<vmem>>, vector<4x1x18xf32>
    tpu.vector_store %arg4[%c0_12, %c0_13, %c0_14], %7 {strides = array<i32>} : memref<4x18x18xf32, #tpu.memory_space<vmem>>, vector<4x1x18xf32>,
    %c0_15 = arith.constant 0 : index
    %c15 = arith.constant 15 : index
    %c0_16 = arith.constant 0 : index
    %9 = vector.load %arg4[%c0_15, %c15, %c0_16] : memref<4x18x18xf32, #tpu.memory_space<vmem>>, vector<4x1x18xf32>
    %c0_17 = arith.constant 0 : index
    %c17_18 = arith.constant 17 : index
    %c0_19 = arith.constant 0 : index
    %10 = vector.load %arg4[%c0_17, %c17_18, %c0_19] : memref<4x18x18xf32, #tpu.memory_space<vmem>>, vector<4x1x18xf32>
    tpu.vector_store %arg4[%c0_17, %c17_18, %c0_19], %9 {strides = array<i32>} : memref<4x18x18xf32, #tpu.memory_space<vmem>>, vector<4x1x18xf32>,
    %c0_20 = arith.constant 0 : index
    %c0_21 = arith.constant 0 : index
    %c1_22 = arith.constant 1 : index
    %11 = vector.load %arg4[%c0_20, %c0_21, %c1_22] : memref<4x18x18xf32, #tpu.memory_space<vmem>>, vector<4x18x16xf32>
    %c0_23 = arith.constant 0 : index
    %c0_24 = arith.constant 0 : index
    %c0_25 = arith.constant 0 : index
    %12 = vector.load %arg4[%c0_23, %c0_24, %c0_25] : memref<4x18x18xf32, #tpu.memory_space<vmem>>, vector<4x18x16xf32>
    %c0_26 = arith.constant 0 : index
    %c0_27 = arith.constant 0 : index
    %c2_28 = arith.constant 2 : index
    %13 = vector.load %arg4[%c0_26, %c0_27, %c2_28] : memref<4x18x18xf32, #tpu.memory_space<vmem>>, vector<4x18x16xf32>
    %14 = arith.addf %12, %13 : vector<4x18x16xf32>
    %15 = arith.addf %11, %11 : vector<4x18x16xf32>
    %16 = arith.addf %14, %15 : vector<4x18x16xf32>
    %17 = vector.extract_strided_slice %16 {offsets = [0, 1, 0], sizes = [4, 16, 16], strides = [1, 1, 1]} : vector<4x18x16xf32> to vector<4x16x16xf32>
    %18 = vector.extract_strided_slice %16 {offsets = [0, 0, 0], sizes = [4, 16, 16], strides = [1, 1, 1]} : vector<4x18x16xf32> to vector<4x16x16xf32>
    %19 = vector.extract_strided_slice %16 {offsets = [0, 2, 0], sizes = [4, 16, 16], strides = [1, 1, 1]} : vector<4x18x16xf32> to vector<4x16x16xf32>
    %20 = arith.addf %18, %19 : vector<4x16x16xf32>
    %21 = arith.addf %17, %17 : vector<4x16x16xf32>
    %22 = arith.addf %20, %21 : vector<4x16x16xf32>
    %cst = arith.constant 6.250000e-02 : f32
    %23 = vector.broadcast %cst : f32 to vector<4x16x16xf32>
    %24 = arith.mulf %22, %23 : vector<4x16x16xf32>
    %c0_29 = arith.constant 0 : index
    %c0_30 = arith.constant 0 : index
    %c0_31 = arith.constant 0 : index
    %c0_32 = arith.constant 0 : index
    %25 = vector.load %arg3[%c0_29, %c0_30, %c0_31, %c0_32] : memref<1x4x16x16xf32, #tpu.memory_space<vmem>>, vector<1x4x16x16xf32>
    %26 = vector.shape_cast %25 : vector<1x4x16x16xf32> to vector<4x16x16xf32>
    %27 = vector.shape_cast %24 : vector<4x16x16xf32> to vector<1x4x16x16xf32>
    tpu.vector_store %arg3[%c0_29, %c0_30, %c0_31, %c0_32], %27 {strides = array<i32>} : memref<1x4x16x16xf32, #tpu.memory_space<vmem>>, vector<1x4x16x16xf32>,
    return
  }
  func.func @transform_0(%arg0: i32, %arg1: i32) -> (i32, i32, i32, i32) {
    %c0_i32 = arith.constant 0 : i32
    %c0_i32_0 = arith.constant 0 : i32
    %c0_i32_1 = arith.constant 0 : i32
    return %arg0, %arg1, %c0_i32, %c0_i32_0 : i32, i32, i32, i32
  }
  func.func @transform_1(%arg0: i32, %arg1: i32) -> (i32, i32, i32, i32) {
    %c0_i32 = arith.constant 0 : i32
    %c0_i32_0 = arith.constant 0 : i32
    %c0_i32_1 = arith.constant 0 : i32
    return %arg0, %arg1, %c0_i32, %c0_i32_0 : i32, i32, i32, i32
  }
}

</mosaic_0001>

<llo_original>
// kernel: tpu_custom_call.1
$region0: #{tpu_custom_call.1}
  #allocation0 [shape = 'u32[]', space=smem, size = 0x4, offset = 0x4, fixed_abs, tag = 'smem constant byte address 0x4 - core index']
  #allocation1 [shape = 'u32[144,128]{1,0:T(1,128)}', space=vmem, size = 0x12000, scoped, tag = 'internal scratch']
  #allocation2 [shape = 'f32[4,18,18]{2,1,0:T(8,128)}', space=vmem, size = 0xc000, scoped, tag = 'scratch operand']
  %s0 = inlined_call_operand.hbm [shape: f32[2,4,16,16], index: 0, kind: input, shape index: {}]
  %s1 = inlined_call_operand.hbm [shape: f32[2,4,16,16], index: 1, kind: output, shape index: {}]
  %s2 = sld [smem:[#allocation0]]
  $region41: #{tpu_custom_call.1} parent=0
    _
  %s4 = ssub.s32 1, %s2
  %s5 = scalar_select 0, %s4, %s2
  $region1: #{tpu_custom_call.1} parent=0
    #allocation3 [shape = 'u8[65536]{0}', space=vmem, size = 0x10000, scoped, tag = 'input window, operand 0']
    #allocation4 [shape = 's32[2]{0}', space=sflag, size = 0x8, scoped, tag = 'scoped memory for tpu_custom_call.1']
    #allocation5 [shape = 's32[2]{0}', space=sflag, size = 0x8, scoped, tag = 'scoped memory for tpu_custom_call.1']
    #allocation6 [shape = 'u8[65536]{0}', space=vmem, size = 0x10000, scoped, tag = 'output window, operand 0']
    %6 = vsyncpa [#allocation4], 0
    %s7 = scalar_lea.sflag [#allocation4], 1
    %8 = vsyncpa %s7, 0
    %9 = vsyncpa [#allocation5], 0
    %s10 = scalar_lea.sflag [#allocation5], 1
    %11 = vsyncpa %s10, 0
    loop: start=0, step=1, limit=4
    $region2: #{tpu_custom_call.1} parent=1 // loop_pre_header
      _
    $region3: #{tpu_custom_call.1} parent=1 // loop_header
      %s13 = sphi 0, %s17
      %p14 = scmp.ge.s32.totalorder %s13, 4
      %s20 = sphi 0, %s32
      %s21 = sphi 0, %s28
      %s22 = sphi 0, %s20
      %s23 = sphi 0, %s21
      %s24 = sphi 0, %s22
      %s25 = sphi 0, %s23
      %s37 = sphi 0, %s39
      %s40 = sphi 0, %s37
      %s41 = sphi 0, %s40
      %s57 = sphi 0, %s41
      %s65 = sphi 0, %s67
      %s68 = sphi 0, %s65
      %s69 = sphi 0, %s68
      %s85 = sphi 0, %s69
    $region4: #{tpu_custom_call.1} parent=1 // loop_header_branch
      %16 = sbr.rel (%p14) target = $region8
    $region5: #{tpu_custom_call.1} parent=1 // loop_body
      %s18 = ssub.s32 %s13, 1
      %s19 = ssub.s32 %s13, 2
      %s26 = sadd.s32 1, %s21
      %p27 = scmp.ge.s32.totalorder %s26, 1
      %s28 = scalar_select %p27, 0, %s26
      %s29 = sadd.s32 1, %s20
      %s30 = scalar_select %p27, %s29, %s20
      %p31 = scmp.ge.s32.totalorder %s30, 2
      %s32 = scalar_select %p31, 0, %s30
      %s33 = ssub.s32 %s20, %s32
      %s34 = ssub.s32 %s21, %s28
      %s35 = sor.u32 %s33, %s34
      %p36 = scmp.eq.s32.totalorder %s35, 0
      %s38 = sadd.s32 %s37, 1
      %s39 = scalar_select %p36, %s37, %s38
      %p42 = pneg %p36
      %p43 = scmp.eq.s32.totalorder %s13, 1
      %p44 = por %p42, %p43
      %p45 = scmp.ne.s32.totalorder %s37, %s40
      %p46 = scmp.eq.s32.totalorder %s13, 0
      %p47 = por %p45, %p46
      %p48 = scmp.ne.s32.totalorder %s37, %s40
      %p49 = scmp.eq.s32.totalorder %s18, 1
      %p50 = por %p48, %p49
      %p51 = scmp.ne.s32.totalorder %s40, %s41
      %p52 = scmp.eq.s32.totalorder %s18, 0
      %p53 = por %p51, %p52
      %p54 = scmp.ne.s32.totalorder %s40, %s41
      %p55 = scmp.eq.s32.totalorder %s19, 1
      %p56 = por %p54, %p55
      %p58 = scmp.ne.s32.totalorder %s41, %s57
      %p59 = scmp.eq.s32.totalorder %s19, 0
      %p60 = por %p58, %p59
      %s61 = ssub.s32 %s20, %s32
      %s62 = ssub.s32 %s21, %s28
      %s63 = sor.u32 %s61, %s62
      %p64 = scmp.eq.s32.totalorder %s63, 0
      %s66 = sadd.s32 %s65, 1
      %s67 = scalar_select %p64, %s65, %s66
      %p70 = pneg %p64
      %p71 = scmp.eq.s32.totalorder %s13, 1
      %p72 = por %p70, %p71
      %p73 = scmp.ne.s32.totalorder %s65, %s68
      %p74 = scmp.eq.s32.totalorder %s13, 0
      %p75 = por %p73, %p74
      %p76 = scmp.ne.s32.totalorder %s65, %s68
      %p77 = scmp.eq.s32.totalorder %s18, 1
      %p78 = por %p76, %p77
      %p79 = scmp.ne.s32.totalorder %s68, %s69
      %p80 = scmp.eq.s32.totalorder %s18, 0
      %p81 = por %p79, %p80
      %p82 = scmp.ne.s32.totalorder %s68, %s69
      %p83 = scmp.eq.s32.totalorder %s19, 1
      %p84 = por %p82, %p83
      %p86 = scmp.ne.s32.totalorder %s69, %s85
      %p87 = scmp.eq.s32.totalorder %s19, 0
      %p88 = por %p86, %p87
      %p89 = scmp.le.s32.totalorder 1, %s13
      %p90 = scmp.lt.s32.totalorder %s13, 3
      %p91 = pnand %p89, %p90
      %p92 = pneg %p91
      // Predicated region
      $region9: #{tpu_custom_call.1} parent=5 // pred_check
        _
      $region10: #{tpu_custom_call.1} parent=5 // pred_check_branch
        %94 = sbr.rel (%p91) target = $region12
      $region11: #{tpu_custom_call.1} parent=5 // pred_region
        %s95 = ssub.s32 %s13, 1
      $region12: #{tpu_custom_call.1} parent=5 // pred_fallthru
        _
      %p96 = scmp.lt.s32.totalorder %s13, 2
      // Predicated region
      $region13: #{tpu_custom_call.1} parent=5 // pred_check
        %p97 = pneg %p96
      $region14: #{tpu_custom_call.1} parent=5 // pred_check_branch
        %99 = sbr.rel (%p97) target = $region16
      $region15: #{tpu_custom_call.1} parent=5 // pred_region
        // Predicated region
        $region17: #{tpu_custom_call.1} parent=15 // pred_check
          %p100 = pneg %p47
        $region18: #{tpu_custom_call.1} parent=15 // pred_check_branch
          %102 = sbr.rel (%p100) target = $region20
        $region19: #{tpu_custom_call.1} parent=15 // pred_region
          %s103 = sand.u32 %s37, 1
          %s104 = scalar_lea.sflag [#allocation4], %s103
          %s105 = sand.u32 %s37, 1
          %s106 = smul.addr %s105, 64
          %s107 = scalar_lea.vmem [#allocation3], %s106
          %s108 = smul.u32 4, %s21
          %s110 = ssub.s32 1024, 1024
          %111 = vsyncadd %s104, %s110
          %s112 = smul.addr %s108, 2
          %s113 = smul.addr %s20, 8
          %s114 = sadd.s32 %s112, %s113
          %s115 = smul.addr %s114, 128
          %s116 = scalar_lea.hbm %s0, %s115
          %s117 = sshll.u32 %s107, 4
          %s118 = int_to_ptr.vmem [resolvable:$true] %s117
          %123 = dma.hbm_to_vmem [thread:$0]  %s116, 1024, %s118, %s104, 128, 128, 8
        $region20: #{tpu_custom_call.1} parent=15 // pred_fallthru
          _
      $region16: #{tpu_custom_call.1} parent=5 // pred_fallthru
        _
      %p124 = scmp.le.s32.totalorder 1, %s13
      %p125 = scmp.lt.s32.totalorder %s13, 3
      %p126 = pnand %p124, %p125
      %p127 = pneg %p126
      // Predicated region
      $region21: #{tpu_custom_call.1} parent=5 // pred_check
        _
      $region22: #{tpu_custom_call.1} parent=5 // pred_check_branch
        %129 = sbr.rel (%p126) target = $region24
      $region23: #{tpu_custom_call.1} parent=5 // pred_region
        %s130 = ssub.s32 %s13, 1
        %s131 = sand.u32 %s40, 1
        %s132 = scalar_lea.sflag [#allocation4], %s131
        %s133 = sand.u32 %s40, 1
        %s134 = smul.addr %s133, 64
        %s135 = scalar_lea.vmem [#allocation3], %s134
        // Predicated region
        $region25: #{tpu_custom_call.1} parent=23 // pred_check
          %p136 = pneg %p53
        $region26: #{tpu_custom_call.1} parent=23 // pred_check_branch
          %138 = sbr.rel (%p136) target = $region28
        $region27: #{tpu_custom_call.1} parent=23 // pred_region
          %139 = dma.done %s132, 1024
        $region28: #{tpu_custom_call.1} parent=23 // pred_fallthru
          _
        %s140 = sand.u32 %s40, 1
        %s141 = scalar_lea.sflag [#allocation4], %s140
        %s142 = sand.u32 %s40, 1
        %s143 = smul.addr %s142, 64
        %s144 = scalar_lea.vmem [#allocation3], %s143
        %p145 = pneg %p53
        %p146 = pneg %p50
        %p147 = pneg %p81
        %p148 = pneg %p78
        %s149 = sand.u32 %s68, 1
        %s150 = scalar_lea.sflag [#allocation5], %s149
        %s151 = sand.u32 %s68, 1
        %s152 = smul.addr %s151, 64
        %s153 = scalar_lea.vmem [#allocation6], %s152
        %s154 = smul.u32 4, %s23
        %s155 = smul.u32 4, %s23
        %v156 = vld [vmem:[%s135] sm:$0xff]
        %v157 = vld [vmem:[%s135 + $0x8] sm:$0xff]
        %v158 = vld [vmem:[%s135 + $0x10] sm:$0xff]
        %v159 = vld [vmem:[%s135 + $0x18] sm:$0xff]
        %v160 = vld [vmem:[%s135 + $0x20] sm:$0xff]
        %v161 = vld [vmem:[%s135 + $0x28] sm:$0xff]
        %v162 = vld [vmem:[%s135 + $0x30] sm:$0xff]
        %v163 = vld [vmem:[%s135 + $0x38] sm:$0xff]
        %172 = vrot.lane.b32.xlu0 %v156, 1
        %v173 = vpop.permute.xlu0 %172
        %174 = vrot.lane.b32.xlu0 %v157, 1
        %v175 = vpop.permute.xlu0 %174
        %176 = vrot.lane.b32.xlu0 %v158, 1
        %v177 = vpop.permute.xlu0 %176
        %178 = vrot.lane.b32.xlu0 %v159, 1
        %v179 = vpop.permute.xlu0 %178
        %180 = vrot.lane.b32.xlu0 %v160, 1
        %v181 = vpop.permute.xlu0 %180
        %182 = vrot.lane.b32.xlu0 %v161, 1
        %v183 = vpop.permute.xlu0 %182
        %184 = vrot.lane.b32.xlu0 %v162, 1
        %v185 = vpop.permute.xlu0 %184
        %186 = vrot.lane.b32.xlu0 %v163, 1
        %v187 = vpop.permute.xlu0 %186
        %vm196 = vcmask 138248
        %197 = vst.msk [vmem:[#allocation2 + $0x1] sm:$0xff] %vm196, %v173
        %198 = vst.msk [vmem:[#allocation2 + $0x9] sm:$0xff] %vm196, %v175
        %199 = vst.msk [vmem:[#allocation2 + $0x19] sm:$0xff] %vm196, %v177
        %200 = vst.msk [vmem:[#allocation2 + $0x21] sm:$0xff] %vm196, %v179
        %201 = vst.msk [vmem:[#allocation2 + $0x31] sm:$0xff] %vm196, %v181
        %202 = vst.msk [vmem:[#allocation2 + $0x39] sm:$0xff] %vm196, %v183
        %203 = vst.msk [vmem:[#allocation2 + $0x49] sm:$0xff] %vm196, %v185
        %204 = vst.msk [vmem:[#allocation2 + $0x51] sm:$0xff] %vm196, %v187
        %205 = vrot.lane.b32.xlu0 %v156, 127
        %v206 = vpop.permute.xlu0 %205
        %207 = vrot.lane.b32.xlu0 %v157, 127
        %v208 = vpop.permute.xlu0 %207
        %209 = vrot.lane.b32.xlu0 %v158, 127
        %v210 = vpop.permute.xlu0 %209
        %211 = vrot.lane.b32.xlu0 %v159, 127
        %v212 = vpop.permute.xlu0 %211
        %213 = vrot.lane.b32.xlu0 %v160, 127
        %v214 = vpop.permute.xlu0 %213
        %215 = vrot.lane.b32.xlu0 %v161, 127
        %v216 = vpop.permute.xlu0 %215
        %217 = vrot.lane.b32.xlu0 %v162, 127
        %v218 = vpop.permute.xlu0 %217
        %219 = vrot.lane.b32.xlu0 %v163, 127
        %v220 = vpop.permute.xlu0 %219
        %vm229 = vcmask 7168
        %230 = vst.msk [vmem:[#allocation2 + $0x1] sm:$0xff] %vm229, %v206
        %231 = vst.msk [vmem:[#allocation2 + $0x9] sm:$0xff] %vm229, %v208
        %232 = vst.msk [vmem:[#allocation2 + $0x19] sm:$0xff] %vm229, %v210
        %233 = vst.msk [vmem:[#allocation2 + $0x21] sm:$0xff] %vm229, %v212
        %234 = vst.msk [vmem:[#allocation2 + $0x31] sm:$0xff] %vm229, %v214
        %235 = vst.msk [vmem:[#allocation2 + $0x39] sm:$0xff] %vm229, %v216
        %236 = vst.msk [vmem:[#allocation2 + $0x49] sm:$0xff] %vm229, %v218
        %237 = vst.msk [vmem:[#allocation2 + $0x51] sm:$0xff] %vm229, %v220
        %238 = vrot.lane.b32.xlu0 %v156, 3
        %v239 = vpop.permute.xlu0 %238
        %240 = vrot.lane.b32.xlu0 %v157, 3
        %v241 = vpop.permute.xlu0 %240
        %242 = vrot.lane.b32.xlu0 %v158, 3
        %v243 = vpop.permute.xlu0 %242
        %244 = vrot.lane.b32.xlu0 %v159, 3
        %v245 = vpop.permute.xlu0 %244
        %246 = vrot.lane.b32.xlu0 %v160, 3
        %v247 = vpop.permute.xlu0 %246
        %248 = vrot.lane.b32.xlu0 %v161, 3
        %v249 = vpop.permute.xlu0 %248
        %250 = vrot.lane.b32.xlu0 %v162, 3
        %v251 = vpop.permute.xlu0 %250
        %252 = vrot.lane.b32.xlu0 %v163, 3
        %v253 = vpop.permute.xlu0 %252
        %vm262 = vcmask 146568
        %263 = vst.msk [vmem:[#allocation2 + $0x1] sm:$0xff] %vm262, %v239
        %264 = vst.msk [vmem:[#allocation2 + $0x9] sm:$0xff] %vm262, %v241
        %265 = vst.msk [vmem:[#allocation2 + $0x19] sm:$0xff] %vm262, %v243
        %266 = vst.msk [vmem:[#allocation2 + $0x21] sm:$0xff] %vm262, %v245
        %267 = vst.msk [vmem:[#allocation2 + $0x31] sm:$0xff] %vm262, %v247
        %268 = vst.msk [vmem:[#allocation2 + $0x39] sm:$0xff] %vm262, %v249
        %269 = vst.msk [vmem:[#allocation2 + $0x49] sm:$0xff] %vm262, %v251
        %270 = vst.msk [vmem:[#allocation2 + $0x51] sm:$0xff] %vm262, %v253
        %v271 = vld [vmem:[#allocation2 + $0x2] sm:$0x1]
        %v272 = vld [vmem:[#allocation2 + $0x1a] sm:$0x1]
        %v273 = vld [vmem:[#allocation2 + $0x32] sm:$0x1]
        %v274 = vld [vmem:[#allocation2 + $0x4a] sm:$0x1]
        %vm275 = vcmask 139264
        %276 = vst.msk [vmem:[#allocation2] sm:$0x1] %vm275, %v271
        %277 = vst.msk [vmem:[#allocation2 + $0x18] sm:$0x1] %vm275, %v272
        %278 = vst.msk [vmem:[#allocation2 + $0x30] sm:$0x1] %vm275, %v273
        %279 = vst.msk [vmem:[#allocation2 + $0x48] sm:$0x1] %vm275, %v274
        %v280 = vld [vmem:[#allocation2 + $0xf] sm:$0x1]
        %v281 = vld [vmem:[#allocation2 + $0x27] sm:$0x1]
        %v282 = vld [vmem:[#allocation2 + $0x3f] sm:$0x1]
        %v283 = vld [vmem:[#allocation2 + $0x57] sm:$0x1]
        %284 = vst.msk [vmem:[#allocation2 + $0x11] sm:$0x1] %vm275, %v280
        %285 = vst.msk [vmem:[#allocation2 + $0x29] sm:$0x1] %vm275, %v281
        %286 = vst.msk [vmem:[#allocation2 + $0x41] sm:$0x1] %vm275, %v282
        %287 = vst.msk [vmem:[#allocation2 + $0x59] sm:$0x1] %vm275, %v283
        %v288 = vld [vmem:[#allocation2] sm:$0xff]
        %v289 = vld [vmem:[#allocation2 + $0x8] sm:$0xff]
        %v290 = vld [vmem:[#allocation2 + $0x10] sm:$0x3]
        %v291 = vld [vmem:[#allocation2 + $0x18] sm:$0xff]
        %v292 = vld [vmem:[#allocation2 + $0x20] sm:$0xff]
        %v293 = vld [vmem:[#allocation2 + $0x28] sm:$0x3]
        %v294 = vld [vmem:[#allocation2 + $0x30] sm:$0xff]
        %v295 = vld [vmem:[#allocation2 + $0x38] sm:$0xff]
        %v296 = vld [vmem:[#allocation2 + $0x40] sm:$0x3]
        %v297 = vld [vmem:[#allocation2 + $0x48] sm:$0xff]
        %v298 = vld [vmem:[#allocation2 + $0x50] sm:$0xff]
        %v299 = vld [vmem:[#allocation2 + $0x58] sm:$0x3]
        %312 = vrot.lane.b32.xlu0 %v288, 126
        %v313 = vpop.permute.xlu0 %312
        %314 = vrot.lane.b32.xlu0 %v289, 126
        %v315 = vpop.permute.xlu0 %314
        %316 = vrot.lane.b32.xlu0 %v290, 126
        %v317 = vpop.permute.xlu0 %316
        %318 = vrot.lane.b32.xlu0 %v291, 126
        %v319 = vpop.permute.xlu0 %318
        %320 = vrot.lane.b32.xlu0 %v292, 126
        %v321 = vpop.permute.xlu0 %320
        %322 = vrot.lane.b32.xlu0 %v293, 126
        %v323 = vpop.permute.xlu0 %322
        %324 = vrot.lane.b32.xlu0 %v294, 126
        %v325 = vpop.permute.xlu0 %324
        %326 = vrot.lane.b32.xlu0 %v295, 126
        %v327 = vpop.permute.xlu0 %326
        %328 = vrot.lane.b32.xlu0 %v296, 126
        %v329 = vpop.permute.xlu0 %328
        %330 = vrot.lane.b32.xlu0 %v297, 126
        %v331 = vpop.permute.xlu0 %330
        %332 = vrot.lane.b32.xlu0 %v298, 126
        %v333 = vpop.permute.xlu0 %332
        %334 = vrot.lane.b32.xlu0 %v299, 126
        %v335 = vpop.permute.xlu0 %334
        %v348 = vadd.f32 %v288, %v313
        %v349 = vadd.f32 %v289, %v315
        %v350 = vadd.f32 %v290, %v317
        %v351 = vadd.f32 %v291, %v319
        %v352 = vadd.f32 %v292, %v321
        %v353 = vadd.f32 %v293, %v323
        %v354 = vadd.f32 %v294, %v325
        %v355 = vadd.f32 %v295, %v327
        %v356 = vadd.f32 %v296, %v329
        %v357 = vadd.f32 %v297, %v331
        %v358 = vadd.f32 %v298, %v333
        %v359 = vadd.f32 %v299, %v335
        %v360 = vadd.f32 %v288, %v288
        %v361 = vadd.f32 %v289, %v289
        %v362 = vadd.f32 %v290, %v290
        %v363 = vadd.f32 %v291, %v291
        %v364 = vadd.f32 %v292, %v292
        %v365 = vadd.f32 %v293, %v293
        %v366 = vadd.f32 %v294, %v294
        %v367 = vadd.f32 %v295, %v295
        %v368 = vadd.f32 %v296, %v296
        %v369 = vadd.f32 %v297, %v297
        %v370 = vadd.f32 %v298, %v298
        %v371 = vadd.f32 %v299, %v299
        %384 = vrot.lane.b32.xlu0 %v360, 127
        %v385 = vpop.permute.xlu0 %384
        %386 = vrot.lane.b32.xlu0 %v361, 127
        %v387 = vpop.permute.xlu0 %386
        %388 = vrot.lane.b32.xlu0 %v362, 127
        %v389 = vpop.permute.xlu0 %388
        %390 = vrot.lane.b32.xlu0 %v363, 127
        %v391 = vpop.permute.xlu0 %390
        %392 = vrot.lane.b32.xlu0 %v364, 127
        %v393 = vpop.permute.xlu0 %392
        %394 = vrot.lane.b32.xlu0 %v365, 127
        %v395 = vpop.permute.xlu0 %394
        %396 = vrot.lane.b32.xlu0 %v366, 127
        %v397 = vpop.permute.xlu0 %396
        %398 = vrot.lane.b32.xlu0 %v367, 127
        %v399 = vpop.permute.xlu0 %398
        %400 = vrot.lane.b32.xlu0 %v368, 127
        %v401 = vpop.permute.xlu0 %400
        %402 = vrot.lane.b32.xlu0 %v369, 127
        %v403 = vpop.permute.xlu0 %402
        %404 = vrot.lane.b32.xlu0 %v370, 127
        %v405 = vpop.permute.xlu0 %404
        %406 = vrot.lane.b32.xlu0 %v371, 127
        %v407 = vpop.permute.xlu0 %406
        %v420 = vadd.f32 %v348, %v385
        %v421 = vadd.f32 %v349, %v387
        %v422 = vadd.f32 %v350, %v389
        %v423 = vadd.f32 %v351, %v391
        %v424 = vadd.f32 %v352, %v393
        %v425 = vadd.f32 %v353, %v395
        %v426 = vadd.f32 %v354, %v397
        %v427 = vadd.f32 %v355, %v399
        %v428 = vadd.f32 %v356, %v401
        %v429 = vadd.f32 %v357, %v403
        %v430 = vadd.f32 %v358, %v405
        %v431 = vadd.f32 %v359, %v407
        %vm444 = vcmask 1045504
        %v445 = vrot.slane %v420, 2
        %v446 = vrot.slane %v421, 2
        %v447 = vsel %vm444, %v445, %v446
        %v448 = vrot.slane %v422, 2
        %v449 = vsel %vm444, %v446, %v448
        %v450 = vrot.slane %v423, 2
        %v451 = vrot.slane %v424, 2
        %v452 = vsel %vm444, %v450, %v451
        %v453 = vrot.slane %v425, 2
        %v454 = vsel %vm444, %v451, %v453
        %v455 = vrot.slane %v426, 2
        %v456 = vrot.slane %v427, 2
        %v457 = vsel %vm444, %v455, %v456
        %v458 = vrot.slane %v428, 2
        %v459 = vsel %vm444, %v456, %v458
        %v460 = vrot.slane %v429, 2
        %v461 = vrot.slane %v430, 2
        %v462 = vsel %vm444, %v460, %v461
        %v463 = vrot.slane %v431, 2
        %v464 = vsel %vm444, %v461, %v463
        %v473 = vadd.f32 %v420, %v447
        %v474 = vadd.f32 %v421, %v449
        %v475 = vadd.f32 %v423, %v452
        %v476 = vadd.f32 %v424, %v454
        %v477 = vadd.f32 %v426, %v457
        %v478 = vadd.f32 %v427, %v459
        %v479 = vadd.f32 %v429, %v462
        %v480 = vadd.f32 %v430, %v464
        %v481 = vadd.f32 %v420, %v420
        %v482 = vadd.f32 %v421, %v421
        %v483 = vadd.f32 %v422, %v422
        %v484 = vadd.f32 %v423, %v423
        %v485 = vadd.f32 %v424, %v424
        %v486 = vadd.f32 %v425, %v425
        %v487 = vadd.f32 %v426, %v426
        %v488 = vadd.f32 %v427, %v427
        %v489 = vadd.f32 %v428, %v428
        %v490 = vadd.f32 %v429, %v429
        %v491 = vadd.f32 %v430, %v430
        %v492 = vadd.f32 %v431, %v431
        %vm505 = vcmask 1046528
        %v506 = vrot.slane %v481, 1
        %v507 = vrot.slane %v482, 1
        %v508 = vsel %vm505, %v506, %v507
        %v509 = vrot.slane %v483, 1
        %v510 = vsel %vm505, %v507, %v509
        %v511 = vrot.slane %v484, 1
        %v512 = vrot.slane %v485, 1
        %v513 = vsel %vm505, %v511, %v512
        %v514 = vrot.slane %v486, 1
        %v515 = vsel %vm505, %v512, %v514
        %v516 = vrot.slane %v487, 1
        %v517 = vrot.slane %v488, 1
        %v518 = vsel %vm505, %v516, %v517
        %v519 = vrot.slane %v489, 1
        %v520 = vsel %vm505, %v517, %v519
        %v521 = vrot.slane %v490, 1
        %v522 = vrot.slane %v491, 1
        %v523 = vsel %vm505, %v521, %v522
        %v524 = vrot.slane %v492, 1
        %v525 = vsel %vm505, %v522, %v524
        %v534 = vadd.f32 %v473, %v508
        %v535 = vadd.f32 %v474, %v510
        %v536 = vadd.f32 %v475, %v513
        %v537 = vadd.f32 %v476, %v515
        %v538 = vadd.f32 %v477, %v518
        %v539 = vadd.f32 %v478, %v520
        %v540 = vadd.f32 %v479, %v523
        %v541 = vadd.f32 %v480, %v525
        %v542 = vmul.f32 %v534, 0.0625
        %v543 = vmul.f32 %v535, 0.0625
        %v544 = vmul.f32 %v536, 0.0625
        %v545 = vmul.f32 %v537, 0.0625
        %v546 = vmul.f32 %v538, 0.0625
        %v547 = vmul.f32 %v539, 0.0625
        %v548 = vmul.f32 %v540, 0.0625
        %v549 = vmul.f32 %v541, 0.0625
        %vm550 = vcmask 130048
        %551 = vst.msk [vmem:[%s153] sm:$0xff] %vm550, %v542
        %552 = vst.msk [vmem:[%s153 + $0x8] sm:$0xff] %vm550, %v543
        %553 = vst.msk [vmem:[%s153 + $0x10] sm:$0xff] %vm550, %v544
        %554 = vst.msk [vmem:[%s153 + $0x18] sm:$0xff] %vm550, %v545
        %555 = vst.msk [vmem:[%s153 + $0x20] sm:$0xff] %vm550, %v546
        %556 = vst.msk [vmem:[%s153 + $0x28] sm:$0xff] %vm550, %v547
        %557 = vst.msk [vmem:[%s153 + $0x30] sm:$0xff] %vm550, %v548
        %558 = vst.msk [vmem:[%s153 + $0x38] sm:$0xff] %vm550, %v549
        %s559 = sand.u32 %s68, 1
        %s560 = scalar_lea.sflag [#allocation5], %s559
        %s561 = sand.u32 %s68, 1
        %s562 = smul.addr %s561, 64
        %s563 = scalar_lea.vmem [#allocation6], %s562
        // Predicated region
        $region29: #{tpu_custom_call.1} parent=23 // pred_check
          %p564 = pneg %p78
        $region30: #{tpu_custom_call.1} parent=23 // pred_check_branch
          %566 = sbr.rel (%p564) target = $region32
        $region31: #{tpu_custom_call.1} parent=23 // pred_region
          %s567 = smul.u32 4, %s23
          %s569 = ssub.s32 1024, 1024
          %570 = vsyncadd %s560, %s569
          %s571 = smul.addr %s567, 2
          %s572 = smul.addr %s22, 8
          %s573 = sadd.s32 %s571, %s572
          %s574 = smul.addr %s573, 128
          %s575 = scalar_lea.hbm %s1, %s574
          %s576 = sshll.u32 %s563, 4
          %s577 = int_to_ptr.vmem [resolvable:$true] %s576
          %582 = dma.vmem_to_hbm [thread:$0]  %s577, 1024, %s575, %s560, 128, 128, 8
        $region32: #{tpu_custom_call.1} parent=23 // pred_fallthru
          _
      $region24: #{tpu_custom_call.1} parent=5 // pred_fallthru
        _
      %p583 = scmp.le.s32.totalorder 2, %s13
      // Predicated region
      $region33: #{tpu_custom_call.1} parent=5 // pred_check
        %p584 = pneg %p583
      $region34: #{tpu_custom_call.1} parent=5 // pred_check_branch
        %586 = sbr.rel (%p584) target = $region36
      $region35: #{tpu_custom_call.1} parent=5 // pred_region
        %s587 = ssub.s32 %s13, 2
        // Predicated region
        $region37: #{tpu_custom_call.1} parent=35 // pred_check
          %p588 = pneg %p84
        $region38: #{tpu_custom_call.1} parent=35 // pred_check_branch
          %590 = sbr.rel (%p588) target = $region40
        $region39: #{tpu_custom_call.1} parent=35 // pred_region
          %s591 = sand.u32 %s69, 1
          %s592 = scalar_lea.sflag [#allocation5], %s591
          %s593 = sand.u32 %s69, 1
          %s594 = smul.addr %s593, 64
          %s595 = scalar_lea.vmem [#allocation6], %s594
          %596 = dma.done %s592, 1024
        $region40: #{tpu_custom_call.1} parent=35 // pred_fallthru
          _
      $region36: #{tpu_custom_call.1} parent=5 // pred_fallthru
        _
    $region6: #{tpu_custom_call.1} parent=1 // loop_footer
      %s17 = sadd.s32 1, %s13
    $region7: #{tpu_custom_call.1} parent=1 // loop_footer_branch
      %12 = sbr.rel target = $region3
    $region8: #{tpu_custom_call.1} parent=1 // loop_exit
      _
    %597 = vsyncpa [#allocation4], 1
    %s598 = scalar_lea.sflag [#allocation4], 1
    %599 = vsyncpa %s598, 1
    %600 = vsyncpa [#allocation5], 1
    %s601 = scalar_lea.sflag [#allocation5], 1
    %602 = vsyncpa %s601, 1

</llo_original>
